<compile_context>
chip_gen: v7x
topology: tpu7x:2x2x1
jax: 0.10.0
libtpu: 0.0.40
codegen_flags: <defaults>
</compile_context>

<pallas_src>
import jax
import jax.numpy as jnp
from jax import lax
from jax.experimental import pallas as pl
from jax.experimental.pallas import tpu as pltpu

# Problem sizes (small demo shapes)
N, C, H, W = 2, 4, 16, 16
BN_EPS = 1e-5


def _make_frelu_kernel(rows, lanes):
    """Kernel for layout x:(rows, lanes); lanes ordered (n, c, w) with w fastest."""

    def kernel(x_ref, w_ref, b_ref, o_ref):
        # x_ref : (rows, lanes)      input slab                                    VMEM
        # w_ref : (9, rows, lanes)   BN-scaled, W-masked 3x3 taps (row-broadcast)  VMEM
        # b_ref : (rows, lanes)      folded BN shift (row-broadcast)               VMEM
        # o_ref : (rows, lanes)      output                                        VMEM
        x = x_ref[...]

        # H halo (conv padding=1 along H): sublane rolls on the XLU, then a single
        # one-row zero fix per direction (2 selects total).
        row = lax.broadcasted_iota(jnp.int32, (rows, lanes), 0)
        x_up = jnp.where(row >= 1,
                         pltpu.roll(x, shift=1, axis=0), 0.0)            # x[h-1] (0 at h=0)
        x_dn = jnp.where(row < rows - 1,
                         pltpu.roll(x, shift=rows - 1, axis=0), 0.0)     # x[h+1] (0 at h=H-1)

        # T(x) = depthwise_conv3x3(x) * bn_scale + bn_shift, accumulated starting from the
        # shift so no trailing add is needed.
        acc = b_ref[...]
        for di, src in enumerate((x_up, x, x_dn)):     # h-offset = di - 1
            for dj in range(3):                        # w-offset = dj - 1
                ow = dj - 1
                if ow == 0:
                    v = src
                else:
                    # Lane rotate rides the XLU; wrapped cross-plane lanes contribute
                    # nothing because the W-boundary masks are folded into the taps.
                    v = pltpu.roll(src, shift=(-ow) % lanes, axis=1)
                acc = acc + v * w_ref[di * 3 + dj]
        o_ref[...] = jnp.maximum(x, acc)               # FReLU: max(x, T(x))

    return kernel


def frelu_pallas(x, w, scale, shift):
    """x: (N,C,H,W) f32; w: (C,3,3) f32 depthwise taps; scale/shift: (C,) folded BN affine."""
    n, c, h, w_dim = x.shape
    lanes = n * c * w_dim
    rows = h
    assert rows % 8 == 0 and lanes % 128 == 0, "demo assumes an (8,128)-aligned slab"

    # Lane-dense relayout (layout plumbing only): (N,C,H,W) -> (H, N*C*W), w fastest.
    # TODO(synk): these transposes are separate XLA ops; at real scale produce/consume this
    # layout natively upstream instead of paying an extra HBM round trip on each side.
    x2d = jnp.transpose(x, (2, 0, 1, 3)).reshape(rows, lanes)

    # Fold BN scale into the 3x3 taps, broadcast per-channel params onto lanes, then fold
    # the W-boundary (padding=1 along W) validity into the left/right tap columns so the
    # kernel needs no lane masks/selects at all.
    w_scaled = (w * scale[:, None, None]).astype(jnp.float32)           # (C,3,3)
    w_tap = jnp.transpose(w_scaled, (1, 2, 0))                          # (kh,kw,C)
    w_lanes = jnp.broadcast_to(w_tap[:, :, None, :, None],
                               (3, 3, n, c, w_dim)).reshape(3, 3, lanes)
    w_coord = jnp.broadcast_to(jnp.arange(w_dim)[None, None, :],
                               (n, c, w_dim)).reshape(lanes)
    col_mask = jnp.stack([
        (w_coord >= 1).astype(jnp.float32),             # kw=0 reads x[..., w-1]
        jnp.ones((lanes,), jnp.float32),                # kw=1 reads x[..., w]
        (w_coord < w_dim - 1).astype(jnp.float32),      # kw=2 reads x[..., w+1]
    ])                                                  # (3, lanes)
    w_lanes = (w_lanes * col_mask[None, :, :]).reshape(9, lanes)

    # Pre-broadcast taps / shift over rows so the kernel is pure vld + mul/add
    # (no in-kernel broadcast_in_dim). Taps are tiny, so the extra bytes are noise.
    w_b = jnp.broadcast_to(w_lanes[:, None, :], (9, rows, lanes))
    shift_lanes = jnp.broadcast_to(shift[None, :, None], (n, c, w_dim)).reshape(1, lanes)
    b_b = jnp.broadcast_to(shift_lanes, (rows, lanes))

    kernel = _make_frelu_kernel(rows, lanes)

    # Single grid step (GRID=1): fastest at this size on single-TC v5e/v6e (and avoids the
    # ~600-cycle per-step overhead + full-slab re-reads that a 2-step grid paid).
    # TODO(synk): for production shapes, tile along the lane axis (lane tiles a multiple of
    # both W and 128) and re-derive the VMEM budget per chip generation (v7x: 64 MiB).
    out2d = pl.pallas_call(
        kernel,
        out_shape=jax.ShapeDtypeStruct((rows, lanes), jnp.float32),
        grid=(1,),
        in_specs=[
            pl.BlockSpec((rows, lanes), lambda i: (0, 0)),        # input slab
            pl.BlockSpec((9, rows, lanes), lambda i: (0, 0, 0)),  # taps (BN + W-mask folded)
            pl.BlockSpec((rows, lanes), lambda i: (0, 0)),        # BN shift
        ],
        out_specs=pl.BlockSpec((rows, lanes), lambda i: (0, 0)),
        compiler_params=pltpu.CompilerParams(
            dimension_semantics=("arbitrary",)),
    )(x2d, w_b, b_b)

    return out2d.reshape(rows, n, c, w_dim).transpose(1, 2, 0, 3)


def frelu_reference(x, w, scale, shift):
    """Plain-JAX reference for verification."""
    c = x.shape[1]
    conv = lax.conv_general_dilated(
        x, w.reshape(c, 1, 3, 3),
        window_strides=(1, 1), padding="SAME",
        dimension_numbers=("NCHW", "OIHW", "NCHW"),
        feature_group_count=c,
        precision=lax.Precision.HIGHEST)
    bn = conv * scale[None, :, None, None] + shift[None, :, None, None]
    return jnp.maximum(x, bn)


if __name__ == "__main__":
    key = jax.random.PRNGKey(0)
    kx, kw, kg, kb, km, kv = jax.random.split(key, 6)

    # Deterministic synthetic parameters (shapes per module __init__).
    x = jax.random.normal(kx, (N, C, H, W), dtype=jnp.float32)
    w = jax.random.normal(kw, (C, 3, 3), dtype=jnp.float32) * 0.2       # depthwise conv weight
    gamma = 1.0 + 0.1 * jax.random.normal(kg, (C,), dtype=jnp.float32)  # BN weight
    beta = 0.1 * jax.random.normal(kb, (C,), dtype=jnp.float32)         # BN bias
    running_mean = 0.1 * jax.random.normal(km, (C,), dtype=jnp.float32)
    running_var = jax.random.uniform(kv, (C,), dtype=jnp.float32,
                                     minval=0.5, maxval=1.5)

    # Fold BatchNorm (eval mode) into a per-channel affine.
    # TODO(synk): PyTorch default is training-mode BN (batch statistics); here BN is folded
    # using running stats (inference semantics).
    scale = gamma / jnp.sqrt(running_var + BN_EPS)
    shift = beta - running_mean * scale

    out = frelu_pallas(x, w, scale, shift)
    out = jax.block_until_ready(out)

    ref = frelu_reference(x, w, scale, shift)
    assert out.shape == (N, C, H, W)
    assert jnp.allclose(out, ref, atol=1e-5, rtol=1e-5), (
        f"max abs err = {jnp.max(jnp.abs(out - ref))}")

    print("KERNEL_OK")
</pallas_src>

<mosaic_0001>
module attributes {stable_mosaic.version = 11 : i64} {
  func.func @kernel(%arg0: i32, %arg1: memref<16x128xf32, #tpu.memory_space<vmem>>, %arg2: memref<9x16x128xf32, #tpu.memory_space<vmem>>, %arg3: memref<16x128xf32, #tpu.memory_space<vmem>>, %arg4: memref<16x128xf32, #tpu.memory_space<vmem>>) attributes {dimension_semantics = [#tpu.dimension_semantics<arbitrary>], iteration_bounds = array<i64: 1>, scalar_prefetch = 0 : i64, scratch_operands = 0 : i64, tpu.core_type = #tpu.core_type<tc>, window_params = [{pipeline_mode = #tpu.pipeline_mode<synchronous>, transform_indices = @transform_0, window_bounds = array<i64: 16, 128>}, {pipeline_mode = #tpu.pipeline_mode<synchronous>, transform_indices = @transform_1, window_bounds = array<i64: 9, 16, 128>}, {pipeline_mode = #tpu.pipeline_mode<synchronous>, transform_indices = @transform_2, window_bounds = array<i64: 16, 128>}, {pipeline_mode = #tpu.pipeline_mode<synchronous>, transform_indices = @transform_3, window_bounds = array<i64: 16, 128>}]} {
    %c0 = arith.constant 0 : index
    %c0_0 = arith.constant 0 : index
    %0 = vector.load %arg1[%c0, %c0_0] : memref<16x128xf32, #tpu.memory_space<vmem>>, vector<16x128xf32>
    %1 = tpu.iota {dimensions = array<i32: 0>} : vector<16x128xi32>
    %c1_i32 = arith.constant 1 : i32
    %2 = vector.broadcast %c1_i32 : i32 to vector<16x128xi32>
    %3 = arith.cmpi sge, %1, %2 : vector<16x128xi32>
    %c1_i32_1 = arith.constant 1 : i32
    %4 = tpu.dynamic_rotate %0 by %c1_i32_1 dim 0 : vector<16x128xf32>, i32 -> vector<16x128xf32>
    %cst = arith.constant 0.000000e+00 : f32
    %5 = vector.broadcast %cst : f32 to vector<16x128xf32>
    %6 = arith.select %3, %4, %5 : vector<16x128xi1>, vector<16x128xf32>
    %c15_i32 = arith.constant 15 : i32
    %7 = vector.broadcast %c15_i32 : i32 to vector<16x128xi32>
    %8 = arith.cmpi slt, %1, %7 : vector<16x128xi32>
    %c15_i32_2 = arith.constant 15 : i32
    %9 = tpu.dynamic_rotate %0 by %c15_i32_2 dim 0 : vector<16x128xf32>, i32 -> vector<16x128xf32>
    %cst_3 = arith.constant 0.000000e+00 : f32
    %10 = vector.broadcast %cst_3 : f32 to vector<16x128xf32>
    %11 = arith.select %8, %9, %10 : vector<16x128xi1>, vector<16x128xf32>
    %c0_4 = arith.constant 0 : index
    %c0_5 = arith.constant 0 : index
    %12 = vector.load %arg3[%c0_4, %c0_5] : memref<16x128xf32, #tpu.memory_space<vmem>>, vector<16x128xf32>
    %c1_i32_6 = arith.constant 1 : i32
    %13 = tpu.dynamic_rotate %6 by %c1_i32_6 dim 1 : vector<16x128xf32>, i32 -> vector<16x128xf32>
    %c0_7 = arith.constant 0 : index
    %c0_8 = arith.constant 0 : index
    %c0_9 = arith.constant 0 : index
    %14 = vector.load %arg2[%c0_7, %c0_8, %c0_9] : memref<9x16x128xf32, #tpu.memory_space<vmem>>, vector<1x16x128xf32>
    %15 = vector.shape_cast %14 : vector<1x16x128xf32> to vector<16x128xf32>
    %16 = arith.mulf %13, %15 : vector<16x128xf32>
    %17 = arith.addf %12, %16 : vector<16x128xf32>
    %c1 = arith.constant 1 : index
    %c0_10 = arith.constant 0 : index
    %c0_11 = arith.constant 0 : index
    %18 = vector.load %arg2[%c1, %c0_10, %c0_11] : memref<9x16x128xf32, #tpu.memory_space<vmem>>, vector<1x16x128xf32>
    %19 = vector.shape_cast %18 : vector<1x16x128xf32> to vector<16x128xf32>
    %20 = arith.mulf %6, %19 : vector<16x128xf32>
    %21 = arith.addf %17, %20 : vector<16x128xf32>
    %c127_i32 = arith.constant 127 : i32
    %22 = tpu.dynamic_rotate %6 by %c127_i32 dim 1 : vector<16x128xf32>, i32 -> vector<16x128xf32>
    %c2 = arith.constant 2 : index
    %c0_12 = arith.constant 0 : index
    %c0_13 = arith.constant 0 : index
    %23 = vector.load %arg2[%c2, %c0_12, %c0_13] : memref<9x16x128xf32, #tpu.memory_space<vmem>>, vector<1x16x128xf32>
    %24 = vector.shape_cast %23 : vector<1x16x128xf32> to vector<16x128xf32>
    %25 = arith.mulf %22, %24 : vector<16x128xf32>
    %26 = arith.addf %21, %25 : vector<16x128xf32>
    %c1_i32_14 = arith.constant 1 : i32
    %27 = tpu.dynamic_rotate %0 by %c1_i32_14 dim 1 : vector<16x128xf32>, i32 -> vector<16x128xf32>
    %c3 = arith.constant 3 : index
    %c0_15 = arith.constant 0 : index
    %c0_16 = arith.constant 0 : index
    %28 = vector.load %arg2[%c3, %c0_15, %c0_16] : memref<9x16x128xf32, #tpu.memory_space<vmem>>, vector<1x16x128xf32>
    %29 = vector.shape_cast %28 : vector<1x16x128xf32> to vector<16x128xf32>
    %30 = arith.mulf %27, %29 : vector<16x128xf32>
    %31 = arith.addf %26, %30 : vector<16x128xf32>
    %c4 = arith.constant 4 : index
    %c0_17 = arith.constant 0 : index
    %c0_18 = arith.constant 0 : index
    %32 = vector.load %arg2[%c4, %c0_17, %c0_18] : memref<9x16x128xf32, #tpu.memory_space<vmem>>, vector<1x16x128xf32>
    %33 = vector.shape_cast %32 : vector<1x16x128xf32> to vector<16x128xf32>
    %34 = arith.mulf %0, %33 : vector<16x128xf32>
    %35 = arith.addf %31, %34 : vector<16x128xf32>
    %c127_i32_19 = arith.constant 127 : i32
    %36 = tpu.dynamic_rotate %0 by %c127_i32_19 dim 1 : vector<16x128xf32>, i32 -> vector<16x128xf32>
    %c5 = arith.constant 5 : index
    %c0_20 = arith.constant 0 : index
    %c0_21 = arith.constant 0 : index
    %37 = vector.load %arg2[%c5, %c0_20, %c0_21] : memref<9x16x128xf32, #tpu.memory_space<vmem>>, vector<1x16x128xf32>
    %38 = vector.shape_cast %37 : vector<1x16x128xf32> to vector<16x128xf32>
    %39 = arith.mulf %36, %38 : vector<16x128xf32>
    %40 = arith.addf %35, %39 : vector<16x128xf32>
    %c1_i32_22 = arith.constant 1 : i32
    %41 = tpu.dynamic_rotate %11 by %c1_i32_22 dim 1 : vector<16x128xf32>, i32 -> vector<16x128xf32>
    %c6 = arith.constant 6 : index
    %c0_23 = arith.constant 0 : index
    %c0_24 = arith.constant 0 : index
    %42 = vector.load %arg2[%c6, %c0_23, %c0_24] : memref<9x16x128xf32, #tpu.memory_space<vmem>>, vector<1x16x128xf32>
    %43 = vector.shape_cast %42 : vector<1x16x128xf32> to vector<16x128xf32>
    %44 = arith.mulf %41, %43 : vector<16x128xf32>
    %45 = arith.addf %40, %44 : vector<16x128xf32>
    %c7 = arith.constant 7 : index
    %c0_25 = arith.constant 0 : index
    %c0_26 = arith.constant 0 : index
    %46 = vector.load %arg2[%c7, %c0_25, %c0_26] : memref<9x16x128xf32, #tpu.memory_space<vmem>>, vector<1x16x128xf32>
    %47 = vector.shape_cast %46 : vector<1x16x128xf32> to vector<16x128xf32>
    %48 = arith.mulf %11, %47 : vector<16x128xf32>
    %49 = arith.addf %45, %48 : vector<16x128xf32>
    %c127_i32_27 = arith.constant 127 : i32
    %50 = tpu.dynamic_rotate %11 by %c127_i32_27 dim 1 : vector<16x128xf32>, i32 -> vector<16x128xf32>
    %c8 = arith.constant 8 : index
    %c0_28 = arith.constant 0 : index
    %c0_29 = arith.constant 0 : index
    %51 = vector.load %arg2[%c8, %c0_28, %c0_29] : memref<9x16x128xf32, #tpu.memory_space<vmem>>, vector<1x16x128xf32>
    %52 = vector.shape_cast %51 : vector<1x16x128xf32> to vector<16x128xf32>
    %53 = arith.mulf %50, %52 : vector<16x128xf32>
    %54 = arith.addf %49, %53 : vector<16x128xf32>
    %55 = arith.maximumf %0, %54 : vector<16x128xf32>
    %c0_30 = arith.constant 0 : index
    %c0_31 = arith.constant 0 : index
    %56 = vector.load %arg4[%c0_30, %c0_31] : memref<16x128xf32, #tpu.memory_space<vmem>>, vector<16x128xf32>
    tpu.vector_store %arg4[%c0_30, %c0_31], %55 {strides = array<i32>} : memref<16x128xf32, #tpu.memory_space<vmem>>, vector<16x128xf32>,
    return
  }
  func.func @transform_0(%arg0: i32) -> (i32, i32) {
    %c0_i32 = arith.constant 0 : i32
    %c0_i32_0 = arith.constant 0 : i32
    %c0_i32_1 = arith.constant 0 : i32
    return %c0_i32, %c0_i32_0 : i32, i32
  }
  func.func @transform_1(%arg0: i32) -> (i32, i32, i32) {
    %c0_i32 = arith.constant 0 : i32
    %c0_i32_0 = arith.constant 0 : i32
    %c0_i32_1 = arith.constant 0 : i32
    %c0_i32_2 = arith.constant 0 : i32
    return %c0_i32, %c0_i32_0, %c0_i32_1 : i32, i32, i32
  }
  func.func @transform_2(%arg0: i32) -> (i32, i32) {
    %c0_i32 = arith.constant 0 : i32
    %c0_i32_0 = arith.constant 0 : i32
    %c0_i32_1 = arith.constant 0 : i32
    return %c0_i32, %c0_i32_0 : i32, i32
  }
  func.func @transform_3(%arg0: i32) -> (i32, i32) {
    %c0_i32 = arith.constant 0 : i32
    %c0_i32_0 = arith.constant 0 : i32
    %c0_i32_1 = arith.constant 0 : i32
    return %c0_i32, %c0_i32_0 : i32, i32
  }
}

</mosaic_0001>

<llo_original>
// kernel: tpu_custom_call.1
$region0: #{tpu_custom_call.1}
  #allocation0 [shape = 'u32[]', space=smem, size = 0x4, offset = 0x4, fixed_abs, tag = 'smem constant byte address 0x4 - core index']
  #allocation1 [shape = 'u32[144,128]{1,0:T(1,128)}', space=vmem, size = 0x12000, scoped, tag = 'internal scratch']
  %s0 = inlined_call_operand.hbm [shape: f32[16,128], index: 0, kind: input, shape index: {}]
  %s1 = inlined_call_operand.hbm [shape: f32[9,16,128], index: 1, kind: input, shape index: {}]
  %s2 = inlined_call_operand.hbm [shape: f32[16,128], index: 2, kind: input, shape index: {}]
  %s3 = inlined_call_operand.hbm [shape: f32[16,128], index: 3, kind: output, shape index: {}]
  %s4 = sld [smem:[#allocation0]]
  $region34: #{tpu_custom_call.1} parent=0
    _
  %s6 = ssub.s32 1, %s4
  %s7 = scalar_select 0, %s6, %s4
  $region1: #{tpu_custom_call.1} parent=0
    #allocation2 [shape = 'u8[8192]{0}', space=vmem, size = 0x2000, scoped, tag = 'input window, operand 0, single buffered']
    #allocation3 [shape = 's32[1]{0}', space=sflag, size = 0x4, scoped, tag = 'scoped memory for tpu_custom_call.1']
    #allocation4 [shape = 's32[1]{0}', space=sflag, size = 0x4, scoped, tag = 'scoped memory for tpu_custom_call.1']
    #allocation5 [shape = 'u8[73728]{0}', space=vmem, size = 0x12000, scoped, tag = 'input window, operand 1, single buffered']
    #allocation6 [shape = 's32[1]{0}', space=sflag, size = 0x4, scoped, tag = 'scoped memory for tpu_custom_call.1']
    #allocation7 [shape = 'u8[8192]{0}', space=vmem, size = 0x2000, scoped, tag = 'input window, operand 2, single buffered']
    #allocation8 [shape = 'u8[8192]{0}', space=vmem, size = 0x2000, scoped, tag = 'output window, operand 0, single buffered']
    %8 = vsyncpa [#allocation3], 0
    %9 = vsyncpa [#allocation6], 0
    %10 = vsyncpa [#allocation4], 0
    // Predicated region
    $region2: #{tpu_custom_call.1} parent=1 // pred_check
      _
    $region3: #{tpu_custom_call.1} parent=1 // pred_check_branch
      %12 = sbr.rel (0) target = $region5
    $region4: #{tpu_custom_call.1} parent=1 // pred_region
      %s14 = ssub.s32 256, 256
      %15 = vsyncadd [#allocation3], %s14
      %s16 = sshll.u32 [#allocation2], 4
      %s17 = int_to_ptr.vmem [resolvable:$true] %s16
      %22 = dma.hbm_to_vmem [thread:$0]  %s0, 256, %s17, [#allocation3], 128, 128, 8
    $region5: #{tpu_custom_call.1} parent=1 // pred_fallthru
      _
    // Predicated region
    $region6: #{tpu_custom_call.1} parent=1 // pred_check
      _
    $region7: #{tpu_custom_call.1} parent=1 // pred_check_branch
      %24 = sbr.rel (0) target = $region9
    $region8: #{tpu_custom_call.1} parent=1 // pred_region
      %s26 = ssub.s32 2304, 2304
      %27 = vsyncadd [#allocation6], %s26
      %s28 = sshll.u32 [#allocation5], 4
      %s29 = int_to_ptr.vmem [resolvable:$true] %s28
      %34 = dma.hbm_to_vmem [thread:$0]  %s1, 2304, %s29, [#allocation6], 128, 128, 8
    $region9: #{tpu_custom_call.1} parent=1 // pred_fallthru
      _
    // Predicated region
    $region10: #{tpu_custom_call.1} parent=1 // pred_check
      _
    $region11: #{tpu_custom_call.1} parent=1 // pred_check_branch
      %36 = sbr.rel (0) target = $region13
    $region12: #{tpu_custom_call.1} parent=1 // pred_region
      %s38 = ssub.s32 256, 256
      %39 = vsyncadd [#allocation6], %s38
      %s40 = sshll.u32 [#allocation7], 4
      %s41 = int_to_ptr.vmem [resolvable:$true] %s40
      %46 = dma.hbm_to_vmem [thread:$0]  %s2, 256, %s41, [#allocation6], 128, 128, 8
    $region13: #{tpu_custom_call.1} parent=1 // pred_fallthru
      _
    // Predicated region
    $region14: #{tpu_custom_call.1} parent=1 // pred_check
      _
    $region15: #{tpu_custom_call.1} parent=1 // pred_check_branch
      %48 = sbr.rel (0) target = $region17
    $region16: #{tpu_custom_call.1} parent=1 // pred_region
      %49 = dma.done [#allocation3], 256
    $region17: #{tpu_custom_call.1} parent=1 // pred_fallthru
      _
    // Predicated region
    $region18: #{tpu_custom_call.1} parent=1 // pred_check
      _
    $region19: #{tpu_custom_call.1} parent=1 // pred_check_branch
      %51 = sbr.rel (0) target = $region21
    $region20: #{tpu_custom_call.1} parent=1 // pred_region
      %52 = dma.done [#allocation6], 2304
    $region21: #{tpu_custom_call.1} parent=1 // pred_fallthru
      _
    // Predicated region
    $region22: #{tpu_custom_call.1} parent=1 // pred_check
      _
    $region23: #{tpu_custom_call.1} parent=1 // pred_check_branch
      %54 = sbr.rel (0) target = $region25
    $region24: #{tpu_custom_call.1} parent=1 // pred_region
      %55 = dma.done [#allocation6], 256
    $region25: #{tpu_custom_call.1} parent=1 // pred_fallthru
      _
    %v56 = vld [vmem:[#allocation2] sm:$0xff]
    %v57 = vld [vmem:[#allocation2 + $0x8] sm:$0xff]
    %v58 = vlaneseq
    %v59 = vshrl.u32 %v58, 7
    %v60 = vadd.s32 %v59, 8
    %vm61 = vcmp.ge.s32.totalorder %v59, 1
    %vm62 = vcmp.ge.s32.totalorder %v60, 1
    %v63 = vrot.slane %v56, 7
    %v64 = vrot.slane %v57, 7
    %vm65 = vcmp.lt.s32.totalorder %v59, 1
    %v66 = vsel %vm65, %v63, %v64
    %v67 = vsel %vm65, %v64, %v63
    %v68 = vsel %vm61, %v67, 0.0
    %v69 = vsel %vm62, %v66, 0.0
    %vm70 = vcmp.lt.s32.totalorder %v59, 15
    %vm71 = vcmp.lt.s32.totalorder %v60, 15
    %v72 = vrot.slane %v56, 1
    %v73 = vrot.slane %v57, 1
    %vm74 = vcmp.lt.s32.totalorder %v59, 7
    %v75 = vsel %vm74, %v72, %v73
    %v76 = vsel %vm74, %v73, %v72
    %v77 = vsel %vm70, %v75, 0.0
    %v78 = vsel %vm71, %v76, 0.0
    %v79 = vld [vmem:[#allocation7] sm:$0xff]
    %v80 = vld [vmem:[#allocation7 + $0x8] sm:$0xff]
    %81 = vrot.lane.b32.xlu0 %v68, 1
    %v82 = vpop.permute.xlu0 %81
    %83 = vrot.lane.b32.xlu0 %v69, 1
    %v84 = vpop.permute.xlu0 %83
    %v85 = vld [vmem:[#allocation5] sm:$0xff]
    %v86 = vld [vmem:[#allocation5 + $0x8] sm:$0xff]
    %v87 = vmul.f32 %v82, %v85
    %v88 = vmul.f32 %v84, %v86
    %v89 = vadd.f32 %v79, %v87
    %v90 = vadd.f32 %v80, %v88
    %s91 = scalar_lea.vmem [#allocation5], 16
    %v92 = vld [vmem:[%s91] sm:$0xff]
    %v93 = vld [vmem:[%s91 + $0x8] sm:$0xff]
    %v94 = vmul.f32 %v68, %v92
    %v95 = vmul.f32 %v69, %v93
    %v96 = vadd.f32 %v89, %v94
    %v97 = vadd.f32 %v90, %v95
    %98 = vrot.lane.b32.xlu0 %v68, 127
    %v99 = vpop.permute.xlu0 %98
    %100 = vrot.lane.b32.xlu0 %v69, 127
    %v101 = vpop.permute.xlu0 %100
    %s102 = scalar_lea.vmem [#allocation5], 32
    %v103 = vld [vmem:[%s102] sm:$0xff]
    %v104 = vld [vmem:[%s102 + $0x8] sm:$0xff]
    %v105 = vmul.f32 %v99, %v103
    %v106 = vmul.f32 %v101, %v104
    %v107 = vadd.f32 %v96, %v105
    %v108 = vadd.f32 %v97, %v106
    %109 = vrot.lane.b32.xlu0 %v56, 1
    %v110 = vpop.permute.xlu0 %109
    %111 = vrot.lane.b32.xlu0 %v57, 1
    %v112 = vpop.permute.xlu0 %111
    %s113 = scalar_lea.vmem [#allocation5], 48
    %v114 = vld [vmem:[%s113] sm:$0xff]
    %v115 = vld [vmem:[%s113 + $0x8] sm:$0xff]
    %v116 = vmul.f32 %v110, %v114
    %v117 = vmul.f32 %v112, %v115
    %v118 = vadd.f32 %v107, %v116
    %v119 = vadd.f32 %v108, %v117
    %s120 = scalar_lea.vmem [#allocation5], 64
    %v121 = vld [vmem:[%s120] sm:$0xff]
    %v122 = vld [vmem:[%s120 + $0x8] sm:$0xff]
    %v123 = vmul.f32 %v56, %v121
    %v124 = vmul.f32 %v57, %v122
    %v125 = vadd.f32 %v118, %v123
    %v126 = vadd.f32 %v119, %v124
    %127 = vrot.lane.b32.xlu0 %v56, 127
    %v128 = vpop.permute.xlu0 %127
    %129 = vrot.lane.b32.xlu0 %v57, 127
    %v130 = vpop.permute.xlu0 %129
    %s131 = scalar_lea.vmem [#allocation5], 80
    %v132 = vld [vmem:[%s131] sm:$0xff]
    %v133 = vld [vmem:[%s131 + $0x8] sm:$0xff]
    %v134 = vmul.f32 %v128, %v132
    %v135 = vmul.f32 %v130, %v133
    %v136 = vadd.f32 %v125, %v134
    %v137 = vadd.f32 %v126, %v135
    %138 = vrot.lane.b32.xlu0 %v77, 1
    %v139 = vpop.permute.xlu0 %138
    %140 = vrot.lane.b32.xlu0 %v78, 1
    %v141 = vpop.permute.xlu0 %140
    %s142 = scalar_lea.vmem [#allocation5], 96
    %v143 = vld [vmem:[%s142] sm:$0xff]
    %v144 = vld [vmem:[%s142 + $0x8] sm:$0xff]
    %v145 = vmul.f32 %v139, %v143
    %v146 = vmul.f32 %v141, %v144
    %v147 = vadd.f32 %v136, %v145
    %v148 = vadd.f32 %v137, %v146
    %s149 = scalar_lea.vmem [#allocation5], 112
    %v150 = vld [vmem:[%s149] sm:$0xff]
    %v151 = vld [vmem:[%s149 + $0x8] sm:$0xff]
    %v152 = vmul.f32 %v77, %v150
    %v153 = vmul.f32 %v78, %v151
    %v154 = vadd.f32 %v147, %v152
    %v155 = vadd.f32 %v148, %v153
    %156 = vrot.lane.b32.xlu0 %v77, 127
    %v157 = vpop.permute.xlu0 %156
    %158 = vrot.lane.b32.xlu0 %v78, 127
    %v159 = vpop.permute.xlu0 %158
    %s160 = scalar_lea.vmem [#allocation5], 128
    %v161 = vld [vmem:[%s160] sm:$0xff]
    %v162 = vld [vmem:[%s160 + $0x8] sm:$0xff]
    %v163 = vmul.f32 %v157, %v161
    %v164 = vmul.f32 %v159, %v162
    %v165 = vadd.f32 %v154, %v163
    %v166 = vadd.f32 %v155, %v164
    %v167 = vmax.f32 %v56, %v165
    %v168 = vmax.f32 %v57, %v166
    %169 = vst [vmem:[#allocation8] sm:$0xff] %v167
    %170 = vst [vmem:[#allocation8 + $0x8] sm:$0xff] %v168
    // Predicated region
    $region26: #{tpu_custom_call.1} parent=1 // pred_check
      _
    $region27: #{tpu_custom_call.1} parent=1 // pred_check_branch
      %172 = sbr.rel (0) target = $region29
    $region28: #{tpu_custom_call.1} parent=1 // pred_region
      %s174 = ssub.s32 256, 256
      %175 = vsyncadd [#allocation4], %s174
      %s176 = sshll.u32 [#allocation8], 4
      %s177 = int_to_ptr.vmem [resolvable:$true] %s176
      %182 = dma.vmem_to_hbm [thread:$0]  %s177, 256, %s3, [#allocation4], 128, 128, 8
    $region29: #{tpu_custom_call.1} parent=1 // pred_fallthru
      _
    // Predicated region
    $region30: #{tpu_custom_call.1} parent=1 // pred_check
      _
    $region31: #{tpu_custom_call.1} parent=1 // pred_check_branch
      %184 = sbr.rel (0) target = $region33
    $region32: #{tpu_custom_call.1} parent=1 // pred_region
      %185 = dma.done [#allocation4], 256
    $region33: #{tpu_custom_call.1} parent=1 // pred_fallthru
      _
    %186 = vsyncpa [#allocation3], 1
    %187 = vsyncpa [#allocation6], 1
    %188 = vsyncpa [#allocation4], 1

</llo_original>
